<compile_context>
chip_gen: v6e
topology: v6e:2x2x1
jax: 0.10.0
libtpu: 0.0.40
codegen_flags: <defaults>
</compile_context>

<pallas_src>
import numpy as np
import jax
import jax.numpy as jnp
from jax.experimental import pallas as pl
from jax.experimental.pallas import tpu as pltpu

# ---- small, deterministic problem sizes -------------------------------------
B = 2          # batch
MEL = 16       # mel_bins (frequency)
T = 16         # time steps
C_IN = 3       # in_channel after replication (folded into the banded conv weights)
C_FEAT = 32    # backbone output channels == `in_features` of the SED block
HIDDEN = 32    # hidden_size of the SED block
N_CLASSES = 8  # num_classes = [8] (single head)
KH = KW = 3
FC = MEL * C_FEAT          # 512: flattened (freq, channel) lane axis of the conv output

# ---- parameter-slab row layout (all offsets are multiples of 8) --------------
_ROW_BAND = 0                    # 3 banded conv-weight matrices, MEL rows each (rows 0..47)
_ROW_BIAS = 3 * MEL              # 48: conv bias tiled over freq (1 row, section padded to 8)
_ROW_W1 = _ROW_BIAS + 8          # 56: fc1 weight (C_FEAT rows)
_ROW_B1 = _ROW_W1 + C_FEAT       # 88: fc1 bias (1 row)
_ROW_WAC = _ROW_B1 + 8           # 96: merged [att | cla] head weight (HIDDEN rows)
_ROW_BAC = _ROW_WAC + HIDDEN     # 128: merged head bias (1 row)
_ROWS = _ROW_BAC + 8             # 136 rows x 512 lanes f32  (~272 KiB)

# TODO(synk): Spectrogram / LogmelFilterBank (STFT path) not implemented; module is
#             configured with wav_2_spectrogram=False so both are nn.Identity.
# TODO(synk): BatchNorm2d / spectrogram_augmentation / mixup / dropout are disabled
#             (use_bn=False, inference mode) and therefore identity here.
# TODO(synk): prepare_params assumes conv_w layout (KH, KW, C_IN, C_FEAT) and a tanh
#             attention nonlinearity; permute real PyTorch Conv2d checkpoints
#             ((C_OUT, C_IN, KH, KW)) and verify tanh-vs-clamp against the reference
#             AttBlock when porting trained weights.


# ------------------------------ fused kernel ---------------------------------
def _audio_sed_kernel(xtp_ref, params_ref, out_ref):
    """Fused backbone conv + SED head, whole batch, single invocation.

    xtp_ref   : (B, T+2, MEL)        time-major spectrogram, time axis zero-padded
    params_ref: (_ROWS, FC)          packed parameter slab (see row layout above)
    out_ref   : (B*T + B, N_CLASSES) rows [0, B*T): segmentwise, rows [B*T, B*T+B): clipwise
    """
    # ---- backbone 3x3 conv (pad=1) + bias + ReLU: 3 banded MXU matmuls ----
    # conv[bt, f*C + c] = sum_dt  X_dt[bt, m] @ Band_dt[m, f*C + c]
    # where X_dt[b*T+t, m] = x[b, m, t+dt-1] (zero outside) and the mel-edge zero
    # padding is folded into Band_dt. Result is lane-dense (32, 512) = 16 vregs.
    conv = jnp.zeros((B * T, FC), jnp.float32)
    for dt in range(KW):
        y = xtp_ref[:, dt:dt + T, :].reshape(B * T, MEL)          # (32, 16)
        band = params_ref[_ROW_BAND + dt * MEL:_ROW_BAND + (dt + 1) * MEL, :]  # (16, 512)
        conv = conv + jnp.dot(y, band, preferred_element_type=jnp.float32)
    conv = jnp.maximum(conv + params_ref[_ROW_BIAS:_ROW_BIAS + 1, :], 0.0)     # (32, 512)

    # ---- mean over frequency: columns are f*C + c -> 4-level lane tree reduce ----
    v = conv[:, :256] + conv[:, 256:]
    v = v[:, :128] + v[:, 128:]
    v = v[:, :64] + v[:, 64:]
    v = v[:, :32] + v[:, 32:]
    x = v * (1.0 / MEL)                                           # (B*T, C_FEAT) = (32, 32)

    # ---- (max + avg) pool over time, k=3 s=1 pad=1 (rolls + edge masks) ----
    x_prev = pltpu.roll(x, shift=1, axis=0)            # row r -> x[r-1] (wrap masked below)
    x_next = pltpu.roll(x, shift=B * T - 1, axis=0)    # == roll(-1): row r -> x[r+1]
    ti = jax.lax.broadcasted_iota(jnp.int32, (B, T, C_FEAT), 1).reshape(B * T, C_FEAT)
    first = ti == 0
    last = ti == T - 1
    prev_m = jnp.where(first, -jnp.inf, x_prev)        # MaxPool1d pads with -inf
    next_m = jnp.where(last, -jnp.inf, x_next)
    prev_z = jnp.where(first, 0.0, x_prev)             # AvgPool1d count_include_pad=True
    next_z = jnp.where(last, 0.0, x_next)
    x_max = jnp.maximum(x, jnp.maximum(prev_m, next_m))
    x_avg = (x + prev_z + next_z) * (1.0 / 3.0)
    xp = x_max + x_avg                                 # (B*T, C_FEAT)
    # dropout(drop_rate[0]) -> identity at inference

    # ---- fc1 + ReLU ----
    w1 = params_ref[_ROW_W1:_ROW_W1 + C_FEAT, 0:HIDDEN]           # (32, 32)
    b1 = params_ref[_ROW_B1:_ROW_B1 + 1, 0:HIDDEN]                # (1, 32)
    h = jnp.maximum(jnp.dot(xp, w1, preferred_element_type=jnp.float32) + b1, 0.0)
    # dropout(drop_rate[1]) -> identity at inference

    # ---- merged attention + classification heads: one matmul, then lane slice ----
    wac = params_ref[_ROW_WAC:_ROW_WAC + HIDDEN, 0:2 * N_CLASSES]  # (32, 16)
    bac = params_ref[_ROW_BAC:_ROW_BAC + 1, 0:2 * N_CLASSES]       # (1, 16)
    z = jnp.dot(h, wac, preferred_element_type=jnp.float32) + bac  # (B*T, 16)
    att = jnp.tanh(z[:, :N_CLASSES])                               # (B*T, 8)
    cla = jax.nn.sigmoid(z[:, N_CLASSES:2 * N_CLASSES])            # (B*T, 8)

    # softmax over time, per batch element (exact normalization so clipwise <= 1)
    att3 = att.reshape(B, T, N_CLASSES)
    cla3 = cla.reshape(B, T, N_CLASSES)
    att3 = att3 - jnp.max(att3, axis=1, keepdims=True)
    e = jnp.exp(att3)
    norm_att = e * pl.reciprocal(jnp.sum(e, axis=1, keepdims=True), approx=False)
    clip = jnp.sum(norm_att * cla3, axis=1)                        # (B, N_CLASSES)

    # ---- single merged output slab: segmentwise rows then clipwise rows ----
    out_ref[0:B * T, :] = cla
    out_ref[B * T:B * T + B, :] = clip


# ------------------------------ wrappers -------------------------------------
def prepare_params(params):
    """One-time host-side folding of module parameters into a single (136, 512) slab.

    - channel replication (x 3) is folded by summing conv_w over C_IN,
    - the 3x3 conv is re-expressed as 3 banded matrices Band_dt (MEL, MEL*C_FEAT) with
      mel-edge zero padding baked in,
    - the conv bias is tiled over frequency,
    - the attention + classification head weights/biases are merged side by side.
    """
    wsum = np.asarray(params["conv_w"], np.float32).sum(axis=2)        # (3, 3, C_FEAT)
    b_conv = np.asarray(params["conv_b"], np.float32).reshape(C_FEAT)
    w1 = np.asarray(params["w1"], np.float32)                          # (C_FEAT, HIDDEN)
    b1 = np.asarray(params["b1"], np.float32).reshape(HIDDEN)
    wa = np.asarray(params["wa"], np.float32)                          # (HIDDEN, N_CLASSES)
    ba = np.asarray(params["ba"], np.float32).reshape(N_CLASSES)
    wc = np.asarray(params["wc"], np.float32)                          # (HIDDEN, N_CLASSES)
    bc = np.asarray(params["bc"], np.float32).reshape(N_CLASSES)

    slab = np.zeros((_ROWS, FC), np.float32)
    # Band_dt[m, f*C + c] = wsum[m - f + 1, dt, c]  (zero outside the 3-tap band / mel edges)
    for dt in range(KW):
        for f in range(MEL):
            for df in range(KH):
                m = f + df - 1
                if 0 <= m < MEL:
                    slab[_ROW_BAND + dt * MEL + m, f * C_FEAT:(f + 1) * C_FEAT] = wsum[df, dt]
    slab[_ROW_BIAS, :] = np.tile(b_conv, MEL)
    slab[_ROW_W1:_ROW_W1 + C_FEAT, 0:HIDDEN] = w1
    slab[_ROW_B1, 0:HIDDEN] = b1
    slab[_ROW_WAC:_ROW_WAC + HIDDEN, 0:N_CLASSES] = wa
    slab[_ROW_WAC:_ROW_WAC + HIDDEN, N_CLASSES:2 * N_CLASSES] = wc
    slab[_ROW_BAC, 0:N_CLASSES] = ba
    slab[_ROW_BAC, N_CLASSES:2 * N_CLASSES] = bc
    return jnp.asarray(slab)


def audio_sed_forward(x_nchw, param_slab):
    """x_nchw: (B, 1, MEL, T) spectrogram -> (clipwise (B, nC), segmentwise (B, T, nC))."""
    # Only wrapper-side work: transpose to time-major and zero-pad the time axis (~2.5 KiB).
    # The conv itself (and its mel-edge padding) happens inside the kernel.
    xt = jnp.transpose(x_nchw[:, 0], (0, 2, 1))              # (B, T, MEL)
    xtp = jnp.pad(xt, ((0, 0), (1, 1), (0, 0)))              # (B, T+2, MEL)
    out = pl.pallas_call(
        _audio_sed_kernel,
        out_shape=jax.ShapeDtypeStruct((B * T + B, N_CLASSES), jnp.float32),
        # Single invocation (no grid): whole-array VMEM blocks; 2 input DMAs + 1 output DMA.
        in_specs=[pl.BlockSpec(memory_space=pltpu.MemorySpace.VMEM),
                  pl.BlockSpec(memory_space=pltpu.MemorySpace.VMEM)],
        out_specs=pl.BlockSpec(memory_space=pltpu.MemorySpace.VMEM),
    )(xtp, param_slab)
    clipwise = out[B * T:]
    segmentwise = out[:B * T].reshape(B, T, N_CLASSES)
    return clipwise, segmentwise


# ---------------------------------- main -------------------------------------
if __name__ == "__main__":
    key = jax.random.PRNGKey(0)
    ks = jax.random.split(key, 8)

    # input: (batch, channel=1, mel_bins, time_steps)
    x = jax.random.normal(ks[0], (B, 1, MEL, T), jnp.float32)

    params = {
        "conv_w": 0.1 * jax.random.normal(ks[1], (3, 3, C_IN, C_FEAT), jnp.float32),
        "conv_b": 0.01 * jax.random.normal(ks[2], (1, C_FEAT), jnp.float32),
        "w1": 0.1 * jax.random.normal(ks[3], (C_FEAT, HIDDEN), jnp.float32),
        "b1": 0.01 * jax.random.normal(ks[4], (1, HIDDEN), jnp.float32),
        "wa": 0.1 * jax.random.normal(ks[5], (HIDDEN, N_CLASSES), jnp.float32),
        "ba": jnp.zeros((1, N_CLASSES), jnp.float32),
        "wc": 0.1 * jax.random.normal(ks[6], (HIDDEN, N_CLASSES), jnp.float32),
        "bc": jnp.zeros((1, N_CLASSES), jnp.float32),
    }

    prepared = prepare_params(params)   # one-time host-side folding into a single slab
    clipwise, segmentwise = jax.jit(audio_sed_forward)(x, prepared)
    jax.block_until_ready((clipwise, segmentwise))

    assert clipwise.shape == (B, N_CLASSES)
    assert segmentwise.shape == (B, T, N_CLASSES)
    assert bool(jnp.all(jnp.isfinite(clipwise)))
    assert bool(jnp.all(jnp.isfinite(segmentwise)))
    assert bool(jnp.all((clipwise >= 0.0) & (clipwise <= 1.0)))   # sigmoid-attn pooled
    assert bool(jnp.all((segmentwise >= 0.0) & (segmentwise <= 1.0)))

    print("KERNEL_OK")
</pallas_src>

<mosaic_0001>
module attributes {stable_mosaic.version = 11 : i64} {
  func.func @_audio_sed_kernel(%arg0: memref<2x18x16xf32, #tpu.memory_space<vmem>>, %arg1: memref<136x512xf32, #tpu.memory_space<vmem>>, %arg2: memref<34x8xf32, #tpu.memory_space<vmem>>) attributes {dimension_semantics = [], scalar_prefetch = 0 : i64, scratch_operands = 0 : i64, tpu.core_type = #tpu.core_type<tc>} {
    %cst = arith.constant 0.000000e+00 : f32
    %0 = vector.broadcast %cst : f32 to vector<32x512xf32>
    %c0 = arith.constant 0 : index
    %c0_0 = arith.constant 0 : index
    %c0_1 = arith.constant 0 : index
    %1 = vector.load %arg0[%c0, %c0_0, %c0_1] : memref<2x18x16xf32, #tpu.memory_space<vmem>>, vector<2x16x16xf32>
    %2 = vector.shape_cast %1 : vector<2x16x16xf32> to vector<32x16xf32>
    %c0_2 = arith.constant 0 : index
    %c0_3 = arith.constant 0 : index
    %3 = vector.load %arg1[%c0_2, %c0_3] : memref<136x512xf32, #tpu.memory_space<vmem>>, vector<16x512xf32>
    %cst_4 = arith.constant dense<0.000000e+00> : vector<32x512xf32>
    %4 = tpu.matmul %2, %3, %cst_4 {dimension_numbers = #tpu.dot_dimension_numbers<[1], [0], [0], [1], [0, 0, 1, 1], [], []>} : vector<32x16xf32>, vector<16x512xf32>, vector<32x512xf32> -> vector<32x512xf32>
    %5 = arith.addf %0, %4 : vector<32x512xf32>
    %c0_5 = arith.constant 0 : index
    %c1 = arith.constant 1 : index
    %c0_6 = arith.constant 0 : index
    %6 = vector.load %arg0[%c0_5, %c1, %c0_6] : memref<2x18x16xf32, #tpu.memory_space<vmem>>, vector<2x16x16xf32>
    %7 = vector.shape_cast %6 : vector<2x16x16xf32> to vector<32x16xf32>
    %c16 = arith.constant 16 : index
    %c0_7 = arith.constant 0 : index
    %8 = vector.load %arg1[%c16, %c0_7] : memref<136x512xf32, #tpu.memory_space<vmem>>, vector<16x512xf32>
    %cst_8 = arith.constant dense<0.000000e+00> : vector<32x512xf32>
    %9 = tpu.matmul %7, %8, %cst_8 {dimension_numbers = #tpu.dot_dimension_numbers<[1], [0], [0], [1], [0, 0, 1, 1], [], []>} : vector<32x16xf32>, vector<16x512xf32>, vector<32x512xf32> -> vector<32x512xf32>
    %10 = arith.addf %5, %9 : vector<32x512xf32>
    %c0_9 = arith.constant 0 : index
    %c2 = arith.constant 2 : index
    %c0_10 = arith.constant 0 : index
    %11 = vector.load %arg0[%c0_9, %c2, %c0_10] : memref<2x18x16xf32, #tpu.memory_space<vmem>>, vector<2x16x16xf32>
    %12 = vector.shape_cast %11 : vector<2x16x16xf32> to vector<32x16xf32>
    %c32 = arith.constant 32 : index
    %c0_11 = arith.constant 0 : index
    %13 = vector.load %arg1[%c32, %c0_11] : memref<136x512xf32, #tpu.memory_space<vmem>>, vector<16x512xf32>
    %cst_12 = arith.constant dense<0.000000e+00> : vector<32x512xf32>
    %14 = tpu.matmul %12, %13, %cst_12 {dimension_numbers = #tpu.dot_dimension_numbers<[1], [0], [0], [1], [0, 0, 1, 1], [], []>} : vector<32x16xf32>, vector<16x512xf32>, vector<32x512xf32> -> vector<32x512xf32>
    %15 = arith.addf %10, %14 : vector<32x512xf32>
    %c48 = arith.constant 48 : index
    %c0_13 = arith.constant 0 : index
    %16 = vector.load %arg1[%c48, %c0_13] : memref<136x512xf32, #tpu.memory_space<vmem>>, vector<1x512xf32>
    %17 = vector.broadcast %16 : vector<1x512xf32> to vector<32x512xf32>
    %18 = arith.addf %15, %17 : vector<32x512xf32>
    %cst_14 = arith.constant 0.000000e+00 : f32
    %19 = vector.broadcast %cst_14 : f32 to vector<32x512xf32>
    %20 = arith.maximumf %18, %19 : vector<32x512xf32>
    %21 = vector.extract_strided_slice %20 {offsets = [0, 0], sizes = [32, 256], strides = [1, 1]} : vector<32x512xf32> to vector<32x256xf32>
    %22 = vector.extract_strided_slice %20 {offsets = [0, 256], sizes = [32, 256], strides = [1, 1]} : vector<32x512xf32> to vector<32x256xf32>
    %23 = arith.addf %21, %22 : vector<32x256xf32>
    %24 = vector.extract_strided_slice %23 {offsets = [0, 0], sizes = [32, 128], strides = [1, 1]} : vector<32x256xf32> to vector<32x128xf32>
    %25 = vector.extract_strided_slice %23 {offsets = [0, 128], sizes = [32, 128], strides = [1, 1]} : vector<32x256xf32> to vector<32x128xf32>
    %26 = arith.addf %24, %25 : vector<32x128xf32>
    %27 = vector.extract_strided_slice %26 {offsets = [0, 0], sizes = [32, 64], strides = [1, 1]} : vector<32x128xf32> to vector<32x64xf32>
    %28 = vector.extract_strided_slice %26 {offsets = [0, 64], sizes = [32, 64], strides = [1, 1]} : vector<32x128xf32> to vector<32x64xf32>
    %29 = arith.addf %27, %28 : vector<32x64xf32>
    %30 = vector.extract_strided_slice %29 {offsets = [0, 0], sizes = [32, 32], strides = [1, 1]} : vector<32x64xf32> to vector<32x32xf32>
    %31 = vector.extract_strided_slice %29 {offsets = [0, 32], sizes = [32, 32], strides = [1, 1]} : vector<32x64xf32> to vector<32x32xf32>
    %32 = arith.addf %30, %31 : vector<32x32xf32>
    %cst_15 = arith.constant 6.250000e-02 : f32
    %33 = vector.broadcast %cst_15 : f32 to vector<32x32xf32>
    %34 = arith.mulf %32, %33 : vector<32x32xf32>
    %c1_i32 = arith.constant 1 : i32
    %35 = tpu.dynamic_rotate %34 by %c1_i32 dim 0 : vector<32x32xf32>, i32 -> vector<32x32xf32>
    %c31_i32 = arith.constant 31 : i32
    %36 = tpu.dynamic_rotate %34 by %c31_i32 dim 0 : vector<32x32xf32>, i32 -> vector<32x32xf32>
    %37 = tpu.iota {dimensions = array<i32: 1>} : vector<2x16x32xi32>
    %38 = vector.shape_cast %37 : vector<2x16x32xi32> to vector<32x32xi32>
    %c0_i32 = arith.constant 0 : i32
    %39 = vector.broadcast %c0_i32 : i32 to vector<32x32xi32>
    %40 = arith.cmpi eq, %38, %39 : vector<32x32xi32>
    %c15_i32 = arith.constant 15 : i32
    %41 = vector.broadcast %c15_i32 : i32 to vector<32x32xi32>
    %42 = arith.cmpi eq, %38, %41 : vector<32x32xi32>
    %cst_16 = arith.constant 0xFF800000 : f32
    %43 = vector.broadcast %cst_16 : f32 to vector<32x32xf32>
    %44 = arith.select %40, %43, %35 : vector<32x32xi1>, vector<32x32xf32>
    %cst_17 = arith.constant 0xFF800000 : f32
    %45 = vector.broadcast %cst_17 : f32 to vector<32x32xf32>
    %46 = arith.select %42, %45, %36 : vector<32x32xi1>, vector<32x32xf32>
    %cst_18 = arith.constant 0.000000e+00 : f32
    %47 = vector.broadcast %cst_18 : f32 to vector<32x32xf32>
    %48 = arith.select %40, %47, %35 : vector<32x32xi1>, vector<32x32xf32>
    %cst_19 = arith.constant 0.000000e+00 : f32
    %49 = vector.broadcast %cst_19 : f32 to vector<32x32xf32>
    %50 = arith.select %42, %49, %36 : vector<32x32xi1>, vector<32x32xf32>
    %51 = arith.maximumf %44, %46 : vector<32x32xf32>
    %52 = arith.maximumf %34, %51 : vector<32x32xf32>
    %53 = arith.addf %34, %48 : vector<32x32xf32>
    %54 = arith.addf %53, %50 : vector<32x32xf32>
    %cst_20 = arith.constant 0.333333343 : f32
    %55 = vector.broadcast %cst_20 : f32 to vector<32x32xf32>
    %56 = arith.mulf %54, %55 : vector<32x32xf32>
    %57 = arith.addf %52, %56 : vector<32x32xf32>
    %c56 = arith.constant 56 : index
    %c0_21 = arith.constant 0 : index
    %58 = vector.load %arg1[%c56, %c0_21] : memref<136x512xf32, #tpu.memory_space<vmem>>, vector<32x32xf32>
    %c88 = arith.constant 88 : index
    %c0_22 = arith.constant 0 : index
    %59 = vector.load %arg1[%c88, %c0_22] : memref<136x512xf32, #tpu.memory_space<vmem>>, vector<1x32xf32>
    %cst_23 = arith.constant dense<0.000000e+00> : vector<32x32xf32>
    %60 = tpu.matmul %57, %58, %cst_23 {dimension_numbers = #tpu.dot_dimension_numbers<[1], [0], [0], [1], [0, 0, 1, 1], [], []>} : vector<32x32xf32>, vector<32x32xf32>, vector<32x32xf32> -> vector<32x32xf32>
    %61 = vector.broadcast %59 : vector<1x32xf32> to vector<32x32xf32>
    %62 = arith.addf %60, %61 : vector<32x32xf32>
    %cst_24 = arith.constant 0.000000e+00 : f32
    %63 = vector.broadcast %cst_24 : f32 to vector<32x32xf32>
    %64 = arith.maximumf %62, %63 : vector<32x32xf32>
    %c96 = arith.constant 96 : index
    %c0_25 = arith.constant 0 : index
    %65 = vector.load %arg1[%c96, %c0_25] : memref<136x512xf32, #tpu.memory_space<vmem>>, vector<32x16xf32>
    %c128 = arith.constant 128 : index
    %c0_26 = arith.constant 0 : index
    %66 = vector.load %arg1[%c128, %c0_26] : memref<136x512xf32, #tpu.memory_space<vmem>>, vector<1x16xf32>
    %cst_27 = arith.constant dense<0.000000e+00> : vector<32x16xf32>
    %67 = tpu.matmul %64, %65, %cst_27 {dimension_numbers = #tpu.dot_dimension_numbers<[1], [0], [0], [1], [0, 0, 1, 1], [], []>} : vector<32x32xf32>, vector<32x16xf32>, vector<32x16xf32> -> vector<32x16xf32>
    %68 = vector.broadcast %66 : vector<1x16xf32> to vector<32x16xf32>
    %69 = arith.addf %67, %68 : vector<32x16xf32>
    %70 = vector.extract_strided_slice %69 {offsets = [0, 0], sizes = [32, 8], strides = [1, 1]} : vector<32x16xf32> to vector<32x8xf32>
    %71 = math.tanh %70 : vector<32x8xf32>
    %72 = vector.extract_strided_slice %69 {offsets = [0, 8], sizes = [32, 8], strides = [1, 1]} : vector<32x16xf32> to vector<32x8xf32>
    %73 = arith.negf %72 : vector<32x8xf32>
    %74 = math.exp %73 : vector<32x8xf32>
    %cst_28 = arith.constant 1.000000e+00 : f32
    %75 = vector.broadcast %cst_28 : f32 to vector<32x8xf32>
    %76 = arith.addf %75, %74 : vector<32x8xf32>
    %77 = arith.divf %75, %76 : vector<32x8xf32>
    %78 = vector.shape_cast %71 : vector<32x8xf32> to vector<2x16x8xf32>
    %79 = vector.shape_cast %77 : vector<32x8xf32> to vector<2x16x8xf32>
    %cst_29 = arith.constant dense<0xFF800000> : vector<2x8xf32>
    %80 = vector.multi_reduction <maximumf>, %78, %cst_29 [1] : vector<2x16x8xf32> to vector<2x8xf32>
    %81 = vector.shape_cast %80 : vector<2x8xf32> to vector<2x1x8xf32>
    %82 = vector.broadcast %81 : vector<2x1x8xf32> to vector<2x16x8xf32>
    %83 = arith.subf %78, %82 : vector<2x16x8xf32>
    %84 = math.exp %83 : vector<2x16x8xf32>
    %cst_30 = arith.constant dense<0.000000e+00> : vector<2x8xf32>
    %85 = vector.multi_reduction <add>, %84, %cst_30 [1] : vector<2x16x8xf32> to vector<2x8xf32>
    %86 = vector.shape_cast %85 : vector<2x8xf32> to vector<2x1x8xf32>
    %87 = tpu.reciprocal %86 : vector<2x1x8xf32> -> vector<2x1x8xf32>
    %88 = vector.broadcast %87 : vector<2x1x8xf32> to vector<2x16x8xf32>
    %89 = arith.mulf %84, %88 : vector<2x16x8xf32>
    %90 = arith.mulf %89, %79 : vector<2x16x8xf32>
    %cst_31 = arith.constant dense<0.000000e+00> : vector<2x8xf32>
    %91 = vector.multi_reduction <add>, %90, %cst_31 [1] : vector<2x16x8xf32> to vector<2x8xf32>
    %c0_32 = arith.constant 0 : index
    %c0_33 = arith.constant 0 : index
    %92 = vector.load %arg2[%c0_32, %c0_33] : memref<34x8xf32, #tpu.memory_space<vmem>>, vector<32x8xf32>
    tpu.vector_store %arg2[%c0_32, %c0_33], %77 {strides = array<i32>} : memref<34x8xf32, #tpu.memory_space<vmem>>, vector<32x8xf32>,
    %c32_34 = arith.constant 32 : index
    %c0_35 = arith.constant 0 : index
    %93 = vector.load %arg2[%c32_34, %c0_35] : memref<34x8xf32, #tpu.memory_space<vmem>>, vector<2x8xf32>
    tpu.vector_store %arg2[%c32_34, %c0_35], %91 {strides = array<i32>} : memref<34x8xf32, #tpu.memory_space<vmem>>, vector<2x8xf32>,
    return
  }
}

</mosaic_0001>

<llo_original>
// kernel: audio_sed_forward.1
$region0: #{audio_sed_forward.1}
  #allocation0 [shape = 'u32[]', space=smem, size = 0x4, offset = 0x4, fixed_abs, tag = 'smem constant byte address 0x4 - core index']
  #allocation1 [shape = 'u32[144,128]{1,0:T(1,128)}', space=vmem, size = 0x12000, scoped, tag = 'internal scratch']
  %s0 = inlined_call_operand.vmem [shape: f32[2,18,16], index: 0, kind: input, shape index: {}]
  %s1 = inlined_call_operand.hbm [shape: f32[136,512], index: 1, kind: input, shape index: {}]
  %s2 = inlined_call_operand.vmem [shape: f32[34,8], index: 2, kind: output, shape index: {}]
  %s3 = sld [smem:[#allocation0]]
  $region22: #{audio_sed_forward.1} parent=0
    _
  %s5 = ssub.s32 1, %s3
  %s6 = scalar_select 0, %s5, %s3
  $region1: #{audio_sed_forward.1} parent=0
    #allocation2 [shape = 'u8[278528]{0}', space=vmem, size = 0x44000, scoped, tag = 'input window, operand 1, single buffered']
    #allocation3 [shape = 's32[1]{0}', space=sflag, size = 0x4, scoped, tag = 'scoped memory for audio_sed_forward.1']
    %7 = vsyncpa [#allocation3], 0
    // Predicated region
    $region2: #{audio_sed_forward.1} parent=1 // pred_check
      _
    $region3: #{audio_sed_forward.1} parent=1 // pred_check_branch
      %9 = sbr.rel (0) target = $region5
    $region4: #{audio_sed_forward.1} parent=1 // pred_region
      _
    $region5: #{audio_sed_forward.1} parent=1 // pred_fallthru
      _
    // Predicated region
    $region6: #{audio_sed_forward.1} parent=1 // pred_check
      _
    $region7: #{audio_sed_forward.1} parent=1 // pred_check_branch
      %11 = sbr.rel (0) target = $region9
    $region8: #{audio_sed_forward.1} parent=1 // pred_region
      %s13 = ssub.s32 8704, 8704
      %14 = vsyncadd [#allocation3], %s13
      %s15 = sshll.u32 [#allocation2], 4
      %s16 = int_to_ptr.vmem [resolvable:$true] %s15
      %21 = dma.hbm_to_vmem [thread:$0]  %s1, 8704, %s16, [#allocation3], 512, 512, 32
    $region9: #{audio_sed_forward.1} parent=1 // pred_fallthru
      _
    // Predicated region
    $region10: #{audio_sed_forward.1} parent=1 // pred_check
      _
    $region11: #{audio_sed_forward.1} parent=1 // pred_check_branch
      %23 = sbr.rel (0) target = $region13
    $region12: #{audio_sed_forward.1} parent=1 // pred_region
      %24 = dma.done [#allocation3], 8704
    $region13: #{audio_sed_forward.1} parent=1 // pred_fallthru
      _
    %v25 = vld [vmem:[%s0] sm:$0xff]
    %v26 = vld [vmem:[%s0 + $0x8] sm:$0xff]
    %v27 = vld [vmem:[%s0 + $0x18] sm:$0xff]
    %v28 = vld [vmem:[%s0 + $0x20] sm:$0xff]
    %v29 = vld [vmem:[#allocation2] sm:$0xff]
    %v30 = vld [vmem:[#allocation2 + $0x8] sm:$0xff]
    %v31 = vld [vmem:[#allocation2 + $0x10] sm:$0xff]
    %v32 = vld [vmem:[#allocation2 + $0x18] sm:$0xff]
    %v33 = vld [vmem:[#allocation2 + $0x20] sm:$0xff]
    %v34 = vld [vmem:[#allocation2 + $0x28] sm:$0xff]
    %v35 = vld [vmem:[#allocation2 + $0x30] sm:$0xff]
    %v36 = vld [vmem:[#allocation2 + $0x38] sm:$0xff]
    %v37 = vld [vmem:[%s0 + $0x1] sm:$0xff]
    %v38 = vld [vmem:[%s0 + $0x9] sm:$0xff]
    %v39 = vld [vmem:[%s0 + $0x19] sm:$0xff]
    %v40 = vld [vmem:[%s0 + $0x21] sm:$0xff]
    %v41 = vld [vmem:[#allocation2 + $0x40] sm:$0xff]
    %v42 = vld [vmem:[#allocation2 + $0x48] sm:$0xff]
    %v43 = vld [vmem:[#allocation2 + $0x50] sm:$0xff]
    %v44 = vld [vmem:[#allocation2 + $0x58] sm:$0xff]
    %v45 = vld [vmem:[#allocation2 + $0x60] sm:$0xff]
    %v46 = vld [vmem:[#allocation2 + $0x68] sm:$0xff]
    %v47 = vld [vmem:[#allocation2 + $0x70] sm:$0xff]
    %v48 = vld [vmem:[#allocation2 + $0x78] sm:$0xff]
    %vm49 = vcmask 130048
    %v51 = vsel %vm49, %v37, 0
    %v54 = vsel %vm49, %v38, 0
    %v57 = vsel %vm49, %v39, 0
    %v60 = vsel %vm49, %v40, 0
    %62 = vmatprep.subr.mxu0 0.0
    %63 = vmatpush1.msra.mxu0 0.0
    %64 = vmatprep.subr.mxu0 0.0
    %65 = vmatpush1.msra.mxu0 0.0
    %66 = vmatprep.subr.mxu0 0.0
    %67 = vmatpush1.msra.mxu0 0.0
    %68 = vmatprep.subr.mxu0 0.0
    %69 = vmatpush1.msra.mxu0 0.0
    %70 = vmatprep.subr.mxu0 0.0
    %71 = vmatpush1.msra.mxu0 0.0
    %72 = vmatprep.subr.mxu0 0.0
    %73 = vmatpush1.msra.mxu0 0.0
    %74 = vmatprep.subr.mxu0 0.0
    %75 = vmatpush1.msra.mxu0 0.0
    %76 = vmatprep.subr.mxu0 0.0
    %77 = vmatpush1.msra.mxu0 0.0
    %78 = vmatprep.subr.mxu0 0.0
    %79 = vmatpush1.msra.mxu0 0.0
    %80 = vmatprep.subr.mxu0 0.0
    %81 = vmatpush1.msra.mxu0 0.0
    %82 = vmatprep.subr.mxu0 0.0
    %83 = vmatpush1.msra.mxu0 0.0
    %84 = vmatprep.subr.mxu0 0.0
    %85 = vmatpush1.msra.mxu0 0.0
    %86 = vmatprep.subr.mxu0 0.0
    %87 = vmatpush1.msra.mxu0 0.0
    %88 = vmatprep.subr.mxu0 0.0
    %89 = vmatpush1.msra.mxu0 0.0
    %90 = vmatprep.subr.mxu0 %v46
    %91 = vmatpush1.msra.mxu0 %v45
    %92 = vmatprep.subr.mxu0 %v42
    %93 = vmatpush1.msra.mxu0 %v41
    %94 = vmatprep.subr.mxu0 0.0
    %95 = vmatpush2.msra.mxu0 0.0
    %96 = vmatprep.subr.mxu0 0.0
    %97 = vmatpush2.msra.mxu0 0.0
    %98 = vmatprep.subr.mxu0 0.0
    %99 = vmatpush2.msra.mxu0 0.0
    %100 = vmatprep.subr.mxu0 0.0
    %101 = vmatpush2.msra.mxu0 0.0
    %102 = vmatprep.subr.mxu0 0.0
    %103 = vmatpush2.msra.mxu0 0.0
    %104 = vmatprep.subr.mxu0 0.0
    %105 = vmatpush2.msra.mxu0 0.0
    %106 = vmatprep.subr.mxu0 0.0
    %107 = vmatpush2.msra.mxu0 0.0
    %108 = vmatprep.subr.mxu0 0.0
    %109 = vmatpush2.msra.mxu0 0.0
    %110 = vmatprep.subr.mxu0 0.0
    %111 = vmatpush2.msra.mxu0 0.0
    %112 = vmatprep.subr.mxu0 0.0
    %113 = vmatpush2.msra.mxu0 0.0
    %114 = vmatprep.subr.mxu0 0.0
    %115 = vmatpush2.msra.mxu0 0.0
    %116 = vmatprep.subr.mxu0 0.0
    %117 = vmatpush2.msra.mxu0 0.0
    %118 = vmatprep.subr.mxu0 0.0
    %119 = vmatpush2.msra.mxu0 0.0
    %120 = vmatprep.subr.mxu0 0.0
    %121 = vmatpush2.msra.mxu0 0.0
    %122 = vmatprep.subr.mxu0 0.0
    %123 = vmatpush2.msra.mxu0 0.0
    %124 = vmatprep.subr.mxu0 0.0
    %125 = vmatpush2.msra.mxu0 0.0
    %126 = vmatprep.mubr.f32.mxu0 0.0
    %127 = vmatmul.mubr.f32.gmra.mxu0 %v51
    %v128 = vpop.f32.mrf.mxu0
    %v129 = vadd.f32 0.0, %v128
    %v130 = vpop.f32.mrf.mxu0
    %v131 = vadd.f32 0.0, %v130
    %132 = vmatprep.mubr.f32.mxu0 0.0
    %133 = vmatmul.mubr.f32.gmra.mxu0 %v54
    %v134 = vpop.f32.mrf.mxu0
    %v135 = vadd.f32 0.0, %v134
    %v136 = vpop.f32.mrf.mxu0
    %v137 = vadd.f32 0.0, %v136
    %138 = vmatprep.mubr.f32.mxu0 0.0
    %139 = vmatmul.mubr.f32.gmra.mxu0 %v57
    %v140 = vpop.f32.mrf.mxu0
    %v141 = vadd.f32 0.0, %v140
    %v142 = vpop.f32.mrf.mxu0
    %v143 = vadd.f32 0.0, %v142
    %144 = vmatprep.mubr.f32.mxu0 0.0
    %145 = vmatmul.mubr.f32.gmra.mxu0 %v60
    %v146 = vpop.f32.mrf.mxu0
    %v147 = vadd.f32 0.0, %v146
    %v148 = vpop.f32.mrf.mxu0
    %v149 = vadd.f32 0.0, %v148
    %150 = vdwg.mxu0
    %151 = vmatprep.subr.mxu0 0.0
    %152 = vmatpush1.msra.mxu0 0.0
    %153 = vmatprep.subr.mxu0 0.0
    %154 = vmatpush1.msra.mxu0 0.0
    %155 = vmatprep.subr.mxu0 0.0
    %156 = vmatpush1.msra.mxu0 0.0
    %157 = vmatprep.subr.mxu0 0.0
    %158 = vmatpush1.msra.mxu0 0.0
    %159 = vmatprep.subr.mxu0 0.0
    %160 = vmatpush1.msra.mxu0 0.0
    %161 = vmatprep.subr.mxu0 0.0
    %162 = vmatpush1.msra.mxu0 0.0
    %163 = vmatprep.subr.mxu0 0.0
    %164 = vmatpush1.msra.mxu0 0.0
    %165 = vmatprep.subr.mxu0 0.0
    %166 = vmatpush1.msra.mxu0 0.0
    %167 = vmatprep.subr.mxu0 0.0
    %168 = vmatpush1.msra.mxu0 0.0
    %169 = vmatprep.subr.mxu0 0.0
    %170 = vmatpush1.msra.mxu0 0.0
    %171 = vmatprep.subr.mxu0 0.0
    %172 = vmatpush1.msra.mxu0 0.0
    %173 = vmatprep.subr.mxu0 0.0
    %174 = vmatpush1.msra.mxu0 0.0
    %175 = vmatprep.subr.mxu0 0.0
    %176 = vmatpush1.msra.mxu0 0.0
    %177 = vmatprep.subr.mxu0 0.0
    %178 = vmatpush1.msra.mxu0 0.0
    %179 = vmatprep.subr.mxu0 %v48
    %180 = vmatpush1.msra.mxu0 %v47
    %181 = vmatprep.subr.mxu0 %v44
    %182 = vmatpush1.msra.mxu0 %v43
    %183 = vmatprep.subr.mxu0 0.0
    %184 = vmatpush2.msra.mxu0 0.0
    %185 = vmatprep.subr.mxu0 0.0
    %186 = vmatpush2.msra.mxu0 0.0
    %187 = vmatprep.subr.mxu0 0.0
    %188 = vmatpush2.msra.mxu0 0.0
    %189 = vmatprep.subr.mxu0 0.0
    %190 = vmatpush2.msra.mxu0 0.0
    %191 = vmatprep.subr.mxu0 0.0
    %192 = vmatpush2.msra.mxu0 0.0
    %193 = vmatprep.subr.mxu0 0.0
    %194 = vmatpush2.msra.mxu0 0.0
    %195 = vmatprep.subr.mxu0 0.0
    %196 = vmatpush2.msra.mxu0 0.0
    %197 = vmatprep.subr.mxu0 0.0
    %198 = vmatpush2.msra.mxu0 0.0
    %199 = vmatprep.subr.mxu0 0.0
    %200 = vmatpush2.msra.mxu0 0.0
    %201 = vmatprep.subr.mxu0 0.0
    %202 = vmatpush2.msra.mxu0 0.0
    %203 = vmatprep.subr.mxu0 0.0
    %204 = vmatpush2.msra.mxu0 0.0
    %205 = vmatprep.subr.mxu0 0.0
    %206 = vmatpush2.msra.mxu0 0.0
    %207 = vmatprep.subr.mxu0 0.0
    %208 = vmatpush2.msra.mxu0 0.0
    %209 = vmatprep.subr.mxu0 0.0
    %210 = vmatpush2.msra.mxu0 0.0
    %211 = vmatprep.subr.mxu0 0.0
    %212 = vmatpush2.msra.mxu0 0.0
    %213 = vmatprep.subr.mxu0 0.0
    %214 = vmatpush2.msra.mxu0 0.0
    %215 = vmatprep.mubr.f32.mxu0 0.0
    %216 = vmatmul.mubr.f32.gmra.mxu0 %v51
    %v217 = vpop.f32.mrf.mxu0
    %v218 = vadd.f32 0.0, %v217
    %v219 = vpop.f32.mrf.mxu0
    %v220 = vadd.f32 0.0, %v219
    %221 = vmatprep.mubr.f32.mxu0 0.0
    %222 = vmatmul.mubr.f32.gmra.mxu0 %v54
    %v223 = vpop.f32.mrf.mxu0
    %v224 = vadd.f32 0.0, %v223
    %v225 = vpop.f32.mrf.mxu0
    %v226 = vadd.f32 0.0, %v225
    %227 = vmatprep.mubr.f32.mxu0 0.0
    %228 = vmatmul.mubr.f32.gmra.mxu0 %v57
    %v229 = vpop.f32.mrf.mxu0
    %v230 = vadd.f32 0.0, %v229
    %v231 = vpop.f32.mrf.mxu0
    %v232 = vadd.f32 0.0, %v231
    %233 = vmatprep.mubr.f32.mxu0 0.0
    %234 = vmatmul.mubr.f32.gmra.mxu0 %v60
    %v235 = vpop.f32.mrf.mxu0
    %v236 = vadd.f32 0.0, %v235
    %v237 = vpop.f32.mrf.mxu0
    %v238 = vadd.f32 0.0, %v237
    %239 = vdwg.mxu0
    %v241 = vsel %vm49, %v25, 0
    %v244 = vsel %vm49, %v26, 0
    %v247 = vsel %vm49, %v27, 0
    %v250 = vsel %vm49, %v28, 0
    %252 = vmatprep.subr.mxu0 0.0
    %253 = vmatpush1.msra.mxu0 0.0
    %254 = vmatprep.subr.mxu0 0.0
    %255 = vmatpush1.msra.mxu0 0.0
    %256 = vmatprep.subr.mxu0 0.0
    %257 = vmatpush1.msra.mxu0 0.0
    %258 = vmatprep.subr.mxu0 0.0
    %259 = vmatpush1.msra.mxu0 0.0
    %260 = vmatprep.subr.mxu0 0.0
    %261 = vmatpush1.msra.mxu0 0.0
    %262 = vmatprep.subr.mxu0 0.0
    %263 = vmatpush1.msra.mxu0 0.0
    %264 = vmatprep.subr.mxu0 0.0
    %265 = vmatpush1.msra.mxu0 0.0
    %266 = vmatprep.subr.mxu0 0.0
    %267 = vmatpush1.msra.mxu0 0.0
    %268 = vmatprep.subr.mxu0 0.0
    %269 = vmatpush1.msra.mxu0 0.0
    %270 = vmatprep.subr.mxu0 0.0
    %271 = vmatpush1.msra.mxu0 0.0
    %272 = vmatprep.subr.mxu0 0.0
    %273 = vmatpush1.msra.mxu0 0.0
    %274 = vmatprep.subr.mxu0 0.0
    %275 = vmatpush1.msra.mxu0 0.0
    %276 = vmatprep.subr.mxu0 0.0
    %277 = vmatpush1.msra.mxu0 0.0
    %278 = vmatprep.subr.mxu0 0.0
    %279 = vmatpush1.msra.mxu0 0.0
    %280 = vmatprep.subr.mxu0 %v34
    %281 = vmatpush1.msra.mxu0 %v33
    %282 = vmatprep.subr.mxu0 %v30
    %283 = vmatpush1.msra.mxu0 %v29
    %284 = vmatprep.subr.mxu0 0.0
    %285 = vmatpush2.msra.mxu0 0.0
    %286 = vmatprep.subr.mxu0 0.0
    %287 = vmatpush2.msra.mxu0 0.0
    %288 = vmatprep.subr.mxu0 0.0
    %289 = vmatpush2.msra.mxu0 0.0
    %290 = vmatprep.subr.mxu0 0.0
    %291 = vmatpush2.msra.mxu0 0.0
    %292 = vmatprep.subr.mxu0 0.0
    %293 = vmatpush2.msra.mxu0 0.0
    %294 = vmatprep.subr.mxu0 0.0
    %295 = vmatpush2.msra.mxu0 0.0
    %296 = vmatprep.subr.mxu0 0.0
    %297 = vmatpush2.msra.mxu0 0.0
    %298 = vmatprep.subr.mxu0 0.0
    %299 = vmatpush2.msra.mxu0 0.0
    %300 = vmatprep.subr.mxu0 0.0
    %301 = vmatpush2.msra.mxu0 0.0
    %302 = vmatprep.subr.mxu0 0.0
    %303 = vmatpush2.msra.mxu0 0.0
    %304 = vmatprep.subr.mxu0 0.0
    %305 = vmatpush2.msra.mxu0 0.0
    %306 = vmatprep.subr.mxu0 0.0
    %307 = vmatpush2.msra.mxu0 0.0
    %308 = vmatprep.subr.mxu0 0.0
    %309 = vmatpush2.msra.mxu0 0.0
    %310 = vmatprep.subr.mxu0 0.0
    %311 = vmatpush2.msra.mxu0 0.0
    %312 = vmatprep.subr.mxu0 0.0
    %313 = vmatpush2.msra.mxu0 0.0
    %314 = vmatprep.subr.mxu0 0.0
    %315 = vmatpush2.msra.mxu0 0.0
    %316 = vmatprep.mubr.f32.mxu0 0.0
    %317 = vmatmul.mubr.f32.gmra.mxu0 %v241
    %v318 = vpop.f32.mrf.mxu0
    %v319 = vadd.f32 %v129, %v318
    %v320 = vpop.f32.mrf.mxu0
    %v321 = vadd.f32 %v131, %v320
    %322 = vmatprep.mubr.f32.mxu0 0.0
    %323 = vmatmul.mubr.f32.gmra.mxu0 %v244
    %v324 = vpop.f32.mrf.mxu0
    %v325 = vadd.f32 %v135, %v324
    %v326 = vpop.f32.mrf.mxu0
    %v327 = vadd.f32 %v137, %v326
    %328 = vmatprep.mubr.f32.mxu0 0.0
    %329 = vmatmul.mubr.f32.gmra.mxu0 %v247
    %v330 = vpop.f32.mrf.mxu0
    %v331 = vadd.f32 %v141, %v330
    %v332 = vpop.f32.mrf.mxu0
    %v333 = vadd.f32 %v143, %v332
    %334 = vmatprep.mubr.f32.mxu0 0.0
    %335 = vmatmul.mubr.f32.gmra.mxu0 %v250
    %v336 = vpop.f32.mrf.mxu0
    %v337 = vadd.f32 %v147, %v336
    %v338 = vpop.f32.mrf.mxu0
    %v339 = vadd.f32 %v149, %v338
    %340 = vdwg.mxu0
    %341 = vmatprep.subr.mxu0 0.0
    %342 = vmatpush1.msra.mxu0 0.0
    %343 = vmatprep.subr.mxu0 0.0
    %344 = vmatpush1.msra.mxu0 0.0
    %345 = vmatprep.subr.mxu0 0.0
    %346 = vmatpush1.msra.mxu0 0.0
    %347 = vmatprep.subr.mxu0 0.0
    %348 = vmatpush1.msra.mxu0 0.0
    %349 = vmatprep.subr.mxu0 0.0
    %350 = vmatpush1.msra.mxu0 0.0
    %351 = vmatprep.subr.mxu0 0.0
    %352 = vmatpush1.msra.mxu0 0.0
    %353 = vmatprep.subr.mxu0 0.0
    %354 = vmatpush1.msra.mxu0 0.0
    %355 = vmatprep.subr.mxu0 0.0
    %356 = vmatpush1.msra.mxu0 0.0
    %357 = vmatprep.subr.mxu0 0.0
    %358 = vmatpush1.msra.mxu0 0.0
    %359 = vmatprep.subr.mxu0 0.0
    %360 = vmatpush1.msra.mxu0 0.0
    %361 = vmatprep.subr.mxu0 0.0
    %362 = vmatpush1.msra.mxu0 0.0
    %363 = vmatprep.subr.mxu0 0.0
    %364 = vmatpush1.msra.mxu0 0.0
    %365 = vmatprep.subr.mxu0 0.0
    %366 = vmatpush1.msra.mxu0 0.0
    %367 = vmatprep.subr.mxu0 0.0
    %368 = vmatpush1.msra.mxu0 0.0
    %369 = vmatprep.subr.mxu0 %v36
    %370 = vmatpush1.msra.mxu0 %v35
    %371 = vmatprep.subr.mxu0 %v32
    %372 = vmatpush1.msra.mxu0 %v31
    %373 = vmatprep.subr.mxu0 0.0
    %374 = vmatpush2.msra.mxu0 0.0
    %375 = vmatprep.subr.mxu0 0.0
    %376 = vmatpush2.msra.mxu0 0.0
    %377 = vmatprep.subr.mxu0 0.0
    %378 = vmatpush2.msra.mxu0 0.0
    %379 = vmatprep.subr.mxu0 0.0
    %380 = vmatpush2.msra.mxu0 0.0
    %381 = vmatprep.subr.mxu0 0.0
    %382 = vmatpush2.msra.mxu0 0.0
    %383 = vmatprep.subr.mxu0 0.0
    %384 = vmatpush2.msra.mxu0 0.0
    %385 = vmatprep.subr.mxu0 0.0
    %386 = vmatpush2.msra.mxu0 0.0
    %387 = vmatprep.subr.mxu0 0.0
    %388 = vmatpush2.msra.mxu0 0.0
    %389 = vmatprep.subr.mxu0 0.0
    %390 = vmatpush2.msra.mxu0 0.0
    %391 = vmatprep.subr.mxu0 0.0
    %392 = vmatpush2.msra.mxu0 0.0
    %393 = vmatprep.subr.mxu0 0.0
    %394 = vmatpush2.msra.mxu0 0.0
    %395 = vmatprep.subr.mxu0 0.0
    %396 = vmatpush2.msra.mxu0 0.0
    %397 = vmatprep.subr.mxu0 0.0
    %398 = vmatpush2.msra.mxu0 0.0
    %399 = vmatprep.subr.mxu0 0.0
    %400 = vmatpush2.msra.mxu0 0.0
    %401 = vmatprep.subr.mxu0 0.0
    %402 = vmatpush2.msra.mxu0 0.0
    %403 = vmatprep.subr.mxu0 0.0
    %404 = vmatpush2.msra.mxu0 0.0
    %405 = vmatprep.mubr.f32.mxu0 0.0
    %406 = vmatmul.mubr.f32.gmra.mxu0 %v241
    %v407 = vpop.f32.mrf.mxu0
    %v408 = vadd.f32 %v218, %v407
    %v409 = vpop.f32.mrf.mxu0
    %v410 = vadd.f32 %v220, %v409
    %411 = vmatprep.mubr.f32.mxu0 0.0
    %412 = vmatmul.mubr.f32.gmra.mxu0 %v244
    %v413 = vpop.f32.mrf.mxu0
    %v414 = vadd.f32 %v224, %v413
    %v415 = vpop.f32.mrf.mxu0
    %v416 = vadd.f32 %v226, %v415
    %417 = vmatprep.mubr.f32.mxu0 0.0
    %418 = vmatmul.mubr.f32.gmra.mxu0 %v247
    %v419 = vpop.f32.mrf.mxu0
    %v420 = vadd.f32 %v230, %v419
    %v421 = vpop.f32.mrf.mxu0
    %v422 = vadd.f32 %v232, %v421
    %423 = vmatprep.mubr.f32.mxu0 0.0
    %424 = vmatmul.mubr.f32.gmra.mxu0 %v250
    %v425 = vpop.f32.mrf.mxu0
    %v426 = vadd.f32 %v236, %v425
    %v427 = vpop.f32.mrf.mxu0
    %v428 = vadd.f32 %v238, %v427
    %429 = vdwg.mxu0
    %v430 = vld [vmem:[%s0 + $0x2] sm:$0xff]
    %v431 = vld [vmem:[%s0 + $0xa] sm:$0xff]
    %v432 = vld [vmem:[%s0 + $0x1a] sm:$0xff]
    %v433 = vld [vmem:[%s0 + $0x22] sm:$0xff]
    %v434 = vld [vmem:[#allocation2 + $0x80] sm:$0xff]
    %v435 = vld [vmem:[#allocation2 + $0x88] sm:$0xff]
    %v436 = vld [vmem:[#allocation2 + $0x90] sm:$0xff]
    %v437 = vld [vmem:[#allocation2 + $0x98] sm:$0xff]
    %v438 = vld [vmem:[#allocation2 + $0xa0] sm:$0xff]
    %v439 = vld [vmem:[#allocation2 + $0xa8] sm:$0xff]
    %v440 = vld [vmem:[#allocation2 + $0xb0] sm:$0xff]
    %v441 = vld [vmem:[#allocation2 + $0xb8] sm:$0xff]
    %v443 = vsel %vm49, %v430, 0
    %v446 = vsel %vm49, %v431, 0
    %v449 = vsel %vm49, %v432, 0
    %v452 = vsel %vm49, %v433, 0
    %454 = vmatprep.subr.mxu0 0.0
    %455 = vmatpush1.msra.mxu0 0.0
    %456 = vmatprep.subr.mxu0 0.0
    %457 = vmatpush1.msra.mxu0 0.0
    %458 = vmatprep.subr.mxu0 0.0
    %459 = vmatpush1.msra.mxu0 0.0
    %460 = vmatprep.subr.mxu0 0.0
    %461 = vmatpush1.msra.mxu0 0.0
    %462 = vmatprep.subr.mxu0 0.0
    %463 = vmatpush1.msra.mxu0 0.0
    %464 = vmatprep.subr.mxu0 0.0
    %465 = vmatpush1.msra.mxu0 0.0
    %466 = vmatprep.subr.mxu0 0.0
    %467 = vmatpush1.msra.mxu0 0.0
    %468 = vmatprep.subr.mxu0 0.0
    %469 = vmatpush1.msra.mxu0 0.0
    %470 = vmatprep.subr.mxu0 0.0
    %471 = vmatpush1.msra.mxu0 0.0
    %472 = vmatprep.subr.mxu0 0.0
    %473 = vmatpush1.msra.mxu0 0.0
    %474 = vmatprep.subr.mxu0 0.0
    %475 = vmatpush1.msra.mxu0 0.0
    %476 = vmatprep.subr.mxu0 0.0
    %477 = vmatpush1.msra.mxu0 0.0
    %478 = vmatprep.subr.mxu0 0.0
    %479 = vmatpush1.msra.mxu0 0.0
    %480 = vmatprep.subr.mxu0 0.0
    %481 = vmatpush1.msra.mxu0 0.0
    %482 = vmatprep.subr.mxu0 %v439
    %483 = vmatpush1.msra.mxu0 %v438
    %484 = vmatprep.subr.mxu0 %v435
    %485 = vmatpush1.msra.mxu0 %v434
    %486 = vmatprep.subr.mxu0 0.0
    %487 = vmatpush2.msra.mxu0 0.0
    %488 = vmatprep.subr.mxu0 0.0
    %489 = vmatpush2.msra.mxu0 0.0
    %490 = vmatprep.subr.mxu0 0.0
    %491 = vmatpush2.msra.mxu0 0.0
    %492 = vmatprep.subr.mxu0 0.0
    %493 = vmatpush2.msra.mxu0 0.0
    %494 = vmatprep.subr.mxu0 0.0
    %495 = vmatpush2.msra.mxu0 0.0
    %496 = vmatprep.subr.mxu0 0.0
    %497 = vmatpush2.msra.mxu0 0.0
    %498 = vmatprep.subr.mxu0 0.0
    %499 = vmatpush2.msra.mxu0 0.0
    %500 = vmatprep.subr.mxu0 0.0
    %501 = vmatpush2.msra.mxu0 0.0
    %502 = vmatprep.subr.mxu0 0.0
    %503 = vmatpush2.msra.mxu0 0.0
    %504 = vmatprep.subr.mxu0 0.0
    %505 = vmatpush2.msra.mxu0 0.0
    %506 = vmatprep.subr.mxu0 0.0
    %507 = vmatpush2.msra.mxu0 0.0
    %508 = vmatprep.subr.mxu0 0.0
    %509 = vmatpush2.msra.mxu0 0.0
    %510 = vmatprep.subr.mxu0 0.0
    %511 = vmatpush2.msra.mxu0 0.0
    %512 = vmatprep.subr.mxu0 0.0
    %513 = vmatpush2.msra.mxu0 0.0
    %514 = vmatprep.subr.mxu0 0.0
    %515 = vmatpush2.msra.mxu0 0.0
    %516 = vmatprep.subr.mxu0 0.0
    %517 = vmatpush2.msra.mxu0 0.0
    %518 = vmatprep.mubr.f32.mxu0 0.0
    %519 = vmatmul.mubr.f32.gmra.mxu0 %v443
    %v520 = vpop.f32.mrf.mxu0
    %v521 = vadd.f32 0.0, %v520
    %v522 = vpop.f32.mrf.mxu0
    %v523 = vadd.f32 0.0, %v522
    %524 = vmatprep.mubr.f32.mxu0 0.0
    %525 = vmatmul.mubr.f32.gmra.mxu0 %v446
    %v526 = vpop.f32.mrf.mxu0
    %v527 = vadd.f32 0.0, %v526
    %v528 = vpop.f32.mrf.mxu0
    %v529 = vadd.f32 0.0, %v528
    %530 = vmatprep.mubr.f32.mxu0 0.0
    %531 = vmatmul.mubr.f32.gmra.mxu0 %v449
    %v532 = vpop.f32.mrf.mxu0
    %v533 = vadd.f32 0.0, %v532
    %v534 = vpop.f32.mrf.mxu0
    %v535 = vadd.f32 0.0, %v534
    %536 = vmatprep.mubr.f32.mxu0 0.0
    %537 = vmatmul.mubr.f32.gmra.mxu0 %v452
    %v538 = vpop.f32.mrf.mxu0
    %v539 = vadd.f32 0.0, %v538
    %v540 = vpop.f32.mrf.mxu0
    %v541 = vadd.f32 0.0, %v540
    %542 = vdwg.mxu0
    %543 = vmatprep.subr.mxu0 0.0
    %544 = vmatpush1.msra.mxu0 0.0
    %545 = vmatprep.subr.mxu0 0.0
    %546 = vmatpush1.msra.mxu0 0.0
    %547 = vmatprep.subr.mxu0 0.0
    %548 = vmatpush1.msra.mxu0 0.0
    %549 = vmatprep.subr.mxu0 0.0
    %550 = vmatpush1.msra.mxu0 0.0
    %551 = vmatprep.subr.mxu0 0.0
    %552 = vmatpush1.msra.mxu0 0.0
    %553 = vmatprep.subr.mxu0 0.0
    %554 = vmatpush1.msra.mxu0 0.0
    %555 = vmatprep.subr.mxu0 0.0
    %556 = vmatpush1.msra.mxu0 0.0
    %557 = vmatprep.subr.mxu0 0.0
    %558 = vmatpush1.msra.mxu0 0.0
    %559 = vmatprep.subr.mxu0 0.0
    %560 = vmatpush1.msra.mxu0 0.0
    %561 = vmatprep.subr.mxu0 0.0
    %562 = vmatpush1.msra.mxu0 0.0
    %563 = vmatprep.subr.mxu0 0.0
    %564 = vmatpush1.msra.mxu0 0.0
    %565 = vmatprep.subr.mxu0 0.0
    %566 = vmatpush1.msra.mxu0 0.0
    %567 = vmatprep.subr.mxu0 0.0
    %568 = vmatpush1.msra.mxu0 0.0
    %569 = vmatprep.subr.mxu0 0.0
    %570 = vmatpush1.msra.mxu0 0.0
    %571 = vmatprep.subr.mxu0 %v441
    %572 = vmatpush1.msra.mxu0 %v440
    %573 = vmatprep.subr.mxu0 %v437
    %574 = vmatpush1.msra.mxu0 %v436
    %575 = vmatprep.subr.mxu0 0.0
    %576 = vmatpush2.msra.mxu0 0.0
    %577 = vmatprep.subr.mxu0 0.0
    %578 = vmatpush2.msra.mxu0 0.0
    %579 = vmatprep.subr.mxu0 0.0
    %580 = vmatpush2.msra.mxu0 0.0
    %581 = vmatprep.subr.mxu0 0.0
    %582 = vmatpush2.msra.mxu0 0.0
    %583 = vmatprep.subr.mxu0 0.0
    %584 = vmatpush2.msra.mxu0 0.0
    %585 = vmatprep.subr.mxu0 0.0
    %586 = vmatpush2.msra.mxu0 0.0
    %587 = vmatprep.subr.mxu0 0.0
    %588 = vmatpush2.msra.mxu0 0.0
    %589 = vmatprep.subr.mxu0 0.0
    %590 = vmatpush2.msra.mxu0 0.0
    %591 = vmatprep.subr.mxu0 0.0
    %592 = vmatpush2.msra.mxu0 0.0
    %593 = vmatprep.subr.mxu0 0.0
    %594 = vmatpush2.msra.mxu0 0.0
    %595 = vmatprep.subr.mxu0 0.0
    %596 = vmatpush2.msra.mxu0 0.0
    %597 = vmatprep.subr.mxu0 0.0
    %598 = vmatpush2.msra.mxu0 0.0
    %599 = vmatprep.subr.mxu0 0.0
    %600 = vmatpush2.msra.mxu0 0.0
    %601 = vmatprep.subr.mxu0 0.0
    %602 = vmatpush2.msra.mxu0 0.0
    %603 = vmatprep.subr.mxu0 0.0
    %604 = vmatpush2.msra.mxu0 0.0
    %605 = vmatprep.subr.mxu0 0.0
    %606 = vmatpush2.msra.mxu0 0.0
    %607 = vmatprep.mubr.f32.mxu0 0.0
    %608 = vmatmul.mubr.f32.gmra.mxu0 %v443
    %v609 = vpop.f32.mrf.mxu0
    %v610 = vadd.f32 0.0, %v609
    %v611 = vpop.f32.mrf.mxu0
    %v612 = vadd.f32 0.0, %v611
    %613 = vmatprep.mubr.f32.mxu0 0.0
    %614 = vmatmul.mubr.f32.gmra.mxu0 %v446
    %v615 = vpop.f32.mrf.mxu0
    %v616 = vadd.f32 0.0, %v615
    %v617 = vpop.f32.mrf.mxu0
    %v618 = vadd.f32 0.0, %v617
    %619 = vmatprep.mubr.f32.mxu0 0.0
    %620 = vmatmul.mubr.f32.gmra.mxu0 %v449
    %v621 = vpop.f32.mrf.mxu0
    %v622 = vadd.f32 0.0, %v621
    %v623 = vpop.f32.mrf.mxu0
    %v624 = vadd.f32 0.0, %v623
    %625 = vmatprep.mubr.f32.mxu0 0.0
    %626 = vmatmul.mubr.f32.gmra.mxu0 %v452
    %v627 = vpop.f32.mrf.mxu0
    %v628 = vadd.f32 0.0, %v627
    %v629 = vpop.f32.mrf.mxu0
    %v630 = vadd.f32 0.0, %v629
    %631 = vdwg.mxu0
    %v632 = vadd.f32 %v319, %v521
    %v633 = vadd.f32 %v321, %v523
    %v634 = vadd.f32 %v408, %v610
    %v635 = vadd.f32 %v410, %v612
    %v636 = vadd.f32 %v325, %v527
    %v637 = vadd.f32 %v327, %v529
    %v638 = vadd.f32 %v414, %v616
    %v639 = vadd.f32 %v416, %v618
    %v640 = vadd.f32 %v331, %v533
    %v641 = vadd.f32 %v333, %v535
    %v642 = vadd.f32 %v420, %v622
    %v643 = vadd.f32 %v422, %v624
    %v644 = vadd.f32 %v337, %v539
    %v645 = vadd.f32 %v339, %v541
    %v646 = vadd.f32 %v426, %v628
    %v647 = vadd.f32 %v428, %v630
    %s648 = scalar_lea.vmem [#allocation2], 192
    %v649 = vld [vmem:[%s648] ss:$8 sm:$0xf]
    %v651 = vlaneseq
    %v652 = vshrl.u32 %v651, 7
    %v653 = vsub.s32 0, %v652
    %v654 = vrot.slane %v649, %v653
    %v655 = vlaneseq
    %v656 = vshrl.u32 %v655, 7
    %v657 = vsub.s32 1, %v656
    %v658 = vrot.slane %v649, %v657
    %v659 = vlaneseq
    %v660 = vshrl.u32 %v659, 7
    %v661 = vsub.s32 2, %v660
    %v662 = vrot.slane %v649, %v661
    %v663 = vlaneseq
    %v664 = vshrl.u32 %v663, 7
    %v665 = vsub.s32 3, %v664
    %v666 = vrot.slane %v649, %v665
    %v671 = vadd.f32 %v632, %v654
    %v672 = vadd.f32 %v633, %v658
    %v673 = vadd.f32 %v634, %v662
    %v674 = vadd.f32 %v635, %v666
    %v675 = vadd.f32 %v636, %v654
    %v676 = vadd.f32 %v637, %v658
    %v677 = vadd.f32 %v638, %v662
    %v678 = vadd.f32 %v639, %v666
    %v679 = vadd.f32 %v640, %v654
    %v680 = vadd.f32 %v641, %v658
    %v681 = vadd.f32 %v642, %v662
    %v682 = vadd.f32 %v643, %v666
    %v683 = vadd.f32 %v644, %v654
    %v684 = vadd.f32 %v645, %v658
    %v685 = vadd.f32 %v646, %v662
    %v686 = vadd.f32 %v647, %v666
    %v687 = vmax.f32 %v671, 0.0
    %v688 = vmax.f32 %v672, 0.0
    %v689 = vmax.f32 %v673, 0.0
    %v690 = vmax.f32 %v674, 0.0
    %v691 = vmax.f32 %v675, 0.0
    %v692 = vmax.f32 %v676, 0.0
    %v693 = vmax.f32 %v677, 0.0
    %v694 = vmax.f32 %v678, 0.0
    %v695 = vmax.f32 %v679, 0.0
    %v696 = vmax.f32 %v680, 0.0
    %v697 = vmax.f32 %v681, 0.0
    %v698 = vmax.f32 %v682, 0.0
    %v699 = vmax.f32 %v683, 0.0
    %v700 = vmax.f32 %v684, 0.0
    %v701 = vmax.f32 %v685, 0.0
    %v702 = vmax.f32 %v686, 0.0
    %v703 = vadd.f32 %v687, %v689
    %v704 = vadd.f32 %v688, %v690
    %v705 = vadd.f32 %v691, %v693
    %v706 = vadd.f32 %v692, %v694
    %v707 = vadd.f32 %v695, %v697
    %v708 = vadd.f32 %v696, %v698
    %v709 = vadd.f32 %v699, %v701
    %v710 = vadd.f32 %v700, %v702
    %v711 = vadd.f32 %v703, %v704
    %v712 = vadd.f32 %v705, %v706
    %v713 = vadd.f32 %v707, %v708
    %v714 = vadd.f32 %v709, %v710
    %719 = vrot.lane.b32.xlu0 %v711, 64
    %v720 = vpop.permute.xlu0 %719
    %721 = vrot.lane.b32.xlu0 %v712, 64
    %v722 = vpop.permute.xlu0 %721
    %723 = vrot.lane.b32.xlu0 %v713, 64
    %v724 = vpop.permute.xlu0 %723
    %725 = vrot.lane.b32.xlu0 %v714, 64
    %v726 = vpop.permute.xlu0 %725
    %v731 = vadd.f32 %v711, %v720
    %v732 = vadd.f32 %v712, %v722
    %v733 = vadd.f32 %v713, %v724
    %v734 = vadd.f32 %v714, %v726
    %739 = vrot.lane.b32.xlu0 %v731, 96
    %v740 = vpop.permute.xlu0 %739
    %741 = vrot.lane.b32.xlu0 %v732, 96
    %v742 = vpop.permute.xlu0 %741
    %743 = vrot.lane.b32.xlu0 %v733, 96
    %v744 = vpop.permute.xlu0 %743
    %745 = vrot.lane.b32.xlu0 %v734, 96
    %v746 = vpop.permute.xlu0 %745
    %v751 = vadd.f32 %v731, %v740
    %v752 = vadd.f32 %v732, %v742
    %v753 = vadd.f32 %v733, %v744
    %v754 = vadd.f32 %v734, %v746
    %v755 = vmul.f32 %v751, 0.0625
    %v756 = vmul.f32 %v752, 0.0625
    %v757 = vmul.f32 %v753, 0.0625
    %v758 = vmul.f32 %v754, 0.0625
    %v759 = vrot.slane %v755, 7
    %v760 = vrot.slane %v756, 7
    %v761 = vrot.slane %v757, 7
    %v762 = vrot.slane %v758, 7
    %v763 = vlaneseq
    %v764 = vshrl.u32 %v763, 7
    %vm765 = vcmp.lt.s32.totalorder %v764, 1
    %v766 = vsel %vm765, %v761, %v762
    %v767 = vsel %vm765, %v760, %v761
    %v768 = vsel %vm765, %v759, %v760
    %v769 = vsel %vm765, %v762, %v759
    %v770 = vrot.slane %v755, 1
    %v771 = vrot.slane %v756, 1
    %v772 = vrot.slane %v757, 1
    %v773 = vrot.slane %v758, 1
    %vm774 = vcmp.lt.s32.totalorder %v764, 7
    %v775 = vsel %vm774, %v772, %v773
    %v776 = vsel %vm774, %v771, %v772
    %v777 = vsel %vm774, %v770, %v771
    %v778 = vsel %vm774, %v773, %v770
    %v779 = vadd.s32 %v764, 8
    %vm780 = vcmp.eq.s32.totalorder %v764, 0
    %vm781 = vcmp.eq.s32.totalorder %v779, 0
    %vm782 = vcmp.eq.s32.totalorder %v764, 15
    %vm783 = vcmp.eq.s32.totalorder %v779, 15
    %v784 = vsel %vm780, -inf, %v769
    %v785 = vsel %vm781, -inf, %v768
    %v786 = vsel %vm780, -inf, %v767
    %v787 = vsel %vm781, -inf, %v766
    %v788 = vsel %vm782, -inf, %v777
    %v789 = vsel %vm783, -inf, %v776
    %v790 = vsel %vm782, -inf, %v775
    %v791 = vsel %vm783, -inf, %v778
    %v792 = vsel %vm780, 0.0, %v769
    %v793 = vsel %vm781, 0.0, %v768
    %v794 = vsel %vm780, 0.0, %v767
    %v795 = vsel %vm781, 0.0, %v766
    %v796 = vsel %vm782, 0.0, %v777
    %v797 = vsel %vm783, 0.0, %v776
    %v798 = vsel %vm782, 0.0, %v775
    %v799 = vsel %vm783, 0.0, %v778
    %v800 = vmax.f32 %v784, %v788
    %v801 = vmax.f32 %v785, %v789
    %v802 = vmax.f32 %v786, %v790
    %v803 = vmax.f32 %v787, %v791
    %v804 = vmax.f32 %v755, %v800
    %v805 = vmax.f32 %v756, %v801
    %v806 = vmax.f32 %v757, %v802
    %v807 = vmax.f32 %v758, %v803
    %v808 = vadd.f32 %v755, %v792
    %v809 = vadd.f32 %v756, %v793
    %v810 = vadd.f32 %v757, %v794
    %v811 = vadd.f32 %v758, %v795
    %v812 = vadd.f32 %v808, %v796
    %v813 = vadd.f32 %v809, %v797
    %v814 = vadd.f32 %v810, %v798
    %v815 = vadd.f32 %v811, %v799
    %v816 = vmul.f32 %v812, 0.33333334
    %v817 = vmul.f32 %v813, 0.33333334
    %v818 = vmul.f32 %v814, 0.33333334
    %v819 = vmul.f32 %v815, 0.33333334
    %v820 = vadd.f32 %v804, %v816
    %v821 = vadd.f32 %v805, %v817
    %v822 = vadd.f32 %v806, %v818
    %v823 = vadd.f32 %v807, %v819
    %v824 = vld [vmem:[#allocation2 + $0xe0] sm:$0xff]
    %v825 = vld [vmem:[#allocation2 + $0x100] sm:$0xff]
    %v826 = vld [vmem:[#allocation2 + $0x120] sm:$0xff]
    %v827 = vld [vmem:[#allocation2 + $0x140] sm:$0xff]
    %v828 = vld [vmem:[#allocation2 + $0x160] ss:$0 sm:$0xff]
    %vm829 = vcmask 261120
    %v831 = vsel %vm829, %v820, 0
    %v834 = vsel %vm829, %v821, 0
    %v837 = vsel %vm829, %v822, 0
    %v840 = vsel %vm829, %v823, 0
    %842 = vmatprep.subr.mxu0 0.0
    %843 = vmatpush1.msra.mxu0 0.0
    %844 = vmatprep.subr.mxu0 0.0
    %845 = vmatpush1.msra.mxu0 0.0
    %846 = vmatprep.subr.mxu0 0.0
    %847 = vmatpush1.msra.mxu0 0.0
    %848 = vmatprep.subr.mxu0 0.0
    %849 = vmatpush1.msra.mxu0 0.0
    %850 = vmatprep.subr.mxu0 0.0
    %851 = vmatpush1.msra.mxu0 0.0
    %852 = vmatprep.subr.mxu0 0.0
    %853 = vmatpush1.msra.mxu0 0.0
    %854 = vmatprep.subr.mxu0 0.0
    %855 = vmatpush1.msra.mxu0 0.0
    %856 = vmatprep.subr.mxu0 0.0
    %857 = vmatpush1.msra.mxu0 0.0
    %858 = vmatprep.subr.mxu0 0.0
    %859 = vmatpush1.msra.mxu0 0.0
    %860 = vmatprep.subr.mxu0 0.0
    %861 = vmatpush1.msra.mxu0 0.0
    %862 = vmatprep.subr.mxu0 0.0
    %863 = vmatpush1.msra.mxu0 0.0
    %864 = vmatprep.subr.mxu0 0.0
    %865 = vmatpush1.msra.mxu0 0.0
    %866 = vmatprep.subr.mxu0 0.0
    %867 = vmatpush1.msra.mxu0 %v827
    %868 = vmatprep.subr.mxu0 0.0
    %869 = vmatpush1.msra.mxu0 %v826
    %870 = vmatprep.subr.mxu0 0.0
    %871 = vmatpush1.msra.mxu0 %v825
    %872 = vmatprep.subr.mxu0 0.0
    %873 = vmatpush1.msra.mxu0 %v824
    %874 = vmatprep.subr.mxu0 0.0
    %875 = vmatpush2.msra.mxu0 0.0
    %876 = vmatprep.subr.mxu0 0.0
    %877 = vmatpush2.msra.mxu0 0.0
    %878 = vmatprep.subr.mxu0 0.0
    %879 = vmatpush2.msra.mxu0 0.0
    %880 = vmatprep.subr.mxu0 0.0
    %881 = vmatpush2.msra.mxu0 0.0
    %882 = vmatprep.subr.mxu0 0.0
    %883 = vmatpush2.msra.mxu0 0.0
    %884 = vmatprep.subr.mxu0 0.0
    %885 = vmatpush2.msra.mxu0 0.0
    %886 = vmatprep.subr.mxu0 0.0
    %887 = vmatpush2.msra.mxu0 0.0
    %888 = vmatprep.subr.mxu0 0.0
    %889 = vmatpush2.msra.mxu0 0.0
    %890 = vmatprep.subr.mxu0 0.0
    %891 = vmatpush2.msra.mxu0 0.0
    %892 = vmatprep.subr.mxu0 0.0
    %893 = vmatpush2.msra.mxu0 0.0
    %894 = vmatprep.subr.mxu0 0.0
    %895 = vmatpush2.msra.mxu0 0.0
    %896 = vmatprep.subr.mxu0 0.0
    %897 = vmatpush2.msra.mxu0 0.0
    %898 = vmatprep.subr.mxu0 0.0
    %899 = vmatpush2.msra.mxu0 0.0
    %900 = vmatprep.subr.mxu0 0.0
    %901 = vmatpush2.msra.mxu0 0.0
    %902 = vmatprep.subr.mxu0 0.0
    %903 = vmatpush2.msra.mxu0 0.0
    %904 = vmatprep.subr.mxu0 0.0
    %905 = vmatpush2.msra.mxu0 0.0
    %906 = vmatprep.mubr.f32.mxu0 0.0
    %907 = vmatmul.mubr.f32.gmra.mxu0 %v831
    %v908 = vpop.f32.mrf.mxu0
    %v909 = vadd.f32 %v828, %v908
    %v910 = vpop.f32.mrf.mxu0
    %911 = vmatprep.mubr.f32.mxu0 0.0
    %912 = vmatmul.mubr.f32.gmra.mxu0 %v834
    %v913 = vpop.f32.mrf.mxu0
    %v914 = vadd.f32 %v828, %v913
    %v915 = vpop.f32.mrf.mxu0
    %916 = vmatprep.mubr.f32.mxu0 0.0
    %917 = vmatmul.mubr.f32.gmra.mxu0 %v837
    %v918 = vpop.f32.mrf.mxu0
    %v919 = vadd.f32 %v828, %v918
    %v920 = vpop.f32.mrf.mxu0
    %921 = vmatprep.mubr.f32.mxu0 0.0
    %922 = vmatmul.mubr.f32.gmra.mxu0 %v840
    %v923 = vpop.f32.mrf.mxu0
    %v924 = vadd.f32 %v828, %v923
    %v925 = vpop.f32.mrf.mxu0
    %926 = vdwg.mxu0
    %v927 = vmax.f32 %v909, 0.0
    %v928 = vmax.f32 %v914, 0.0
    %v929 = vmax.f32 %v919, 0.0
    %v930 = vmax.f32 %v924, 0.0
    %v931 = vld [vmem:[#allocation2 + $0x180] sm:$0xff]
    %v932 = vld [vmem:[#allocation2 + $0x1a0] sm:$0xff]
    %v933 = vld [vmem:[#allocation2 + $0x1c0] sm:$0xff]
    %v934 = vld [vmem:[#allocation2 + $0x1e0] sm:$0xff]
    %v935 = vld [vmem:[#allocation2 + $0x200] ss:$0 sm:$0xff]
    %v937 = vsel %vm829, %v927, 0
    %v940 = vsel %vm829, %v928, 0
    %v943 = vsel %vm829, %v929, 0
    %v946 = vsel %vm829, %v930, 0
    %948 = vmatprep.subr.mxu0 0.0
    %949 = vmatpush1.msra.mxu0 0.0
    %950 = vmatprep.subr.mxu0 0.0
    %951 = vmatpush1.msra.mxu0 0.0
    %952 = vmatprep.subr.mxu0 0.0
    %953 = vmatpush1.msra.mxu0 0.0
    %954 = vmatprep.subr.mxu0 0.0
    %955 = vmatpush1.msra.mxu0 0.0
    %956 = vmatprep.subr.mxu0 0.0
    %957 = vmatpush1.msra.mxu0 0.0
    %958 = vmatprep.subr.mxu0 0.0
    %959 = vmatpush1.msra.mxu0 0.0
    %960 = vmatprep.subr.mxu0 0.0
    %961 = vmatpush1.msra.mxu0 0.0
    %962 = vmatprep.subr.mxu0 0.0
    %963 = vmatpush1.msra.mxu0 0.0
    %964 = vmatprep.subr.mxu0 0.0
    %965 = vmatpush1.msra.mxu0 0.0
    %966 = vmatprep.subr.mxu0 0.0
    %967 = vmatpush1.msra.mxu0 0.0
    %968 = vmatprep.subr.mxu0 0.0
    %969 = vmatpush1.msra.mxu0 0.0
    %970 = vmatprep.subr.mxu0 0.0
    %971 = vmatpush1.msra.mxu0 0.0
    %972 = vmatprep.subr.mxu0 0.0
    %973 = vmatpush1.msra.mxu0 %v934
    %974 = vmatprep.subr.mxu0 0.0
    %975 = vmatpush1.msra.mxu0 %v933
    %976 = vmatprep.subr.mxu0 0.0
    %977 = vmatpush1.msra.mxu0 %v932
    %978 = vmatprep.subr.mxu0 0.0
    %979 = vmatpush1.msra.mxu0 %v931
    %980 = vmatprep.subr.mxu0 0.0
    %981 = vmatpush2.msra.mxu0 0.0
    %982 = vmatprep.subr.mxu0 0.0
    %983 = vmatpush2.msra.mxu0 0.0
    %984 = vmatprep.subr.mxu0 0.0
    %985 = vmatpush2.msra.mxu0 0.0
    %986 = vmatprep.subr.mxu0 0.0
    %987 = vmatpush2.msra.mxu0 0.0
    %988 = vmatprep.subr.mxu0 0.0
    %989 = vmatpush2.msra.mxu0 0.0
    %990 = vmatprep.subr.mxu0 0.0
    %991 = vmatpush2.msra.mxu0 0.0
    %992 = vmatprep.subr.mxu0 0.0
    %993 = vmatpush2.msra.mxu0 0.0
    %994 = vmatprep.subr.mxu0 0.0
    %995 = vmatpush2.msra.mxu0 0.0
    %996 = vmatprep.subr.mxu0 0.0
    %997 = vmatpush2.msra.mxu0 0.0
    %998 = vmatprep.subr.mxu0 0.0
    %999 = vmatpush2.msra.mxu0 0.0
    %1000 = vmatprep.subr.mxu0 0.0
    %1001 = vmatpush2.msra.mxu0 0.0
    %1002 = vmatprep.subr.mxu0 0.0
    %1003 = vmatpush2.msra.mxu0 0.0
    %1004 = vmatprep.subr.mxu0 0.0
    %1005 = vmatpush2.msra.mxu0 0.0
    %1006 = vmatprep.subr.mxu0 0.0
    %1007 = vmatpush2.msra.mxu0 0.0
    %1008 = vmatprep.subr.mxu0 0.0
    %1009 = vmatpush2.msra.mxu0 0.0
    %1010 = vmatprep.subr.mxu0 0.0
    %1011 = vmatpush2.msra.mxu0 0.0
    %1012 = vmatprep.mubr.f32.mxu0 0.0
    %1013 = vmatmul.mubr.f32.gmra.mxu0 %v937
    %v1014 = vpop.f32.mrf.mxu0
    %v1015 = vadd.f32 %v935, %v1014
    %v1016 = vpop.f32.mrf.mxu0
    %1017 = vmatprep.mubr.f32.mxu0 0.0
    %1018 = vmatmul.mubr.f32.gmra.mxu0 %v940
    %v1019 = vpop.f32.mrf.mxu0
    %v1020 = vadd.f32 %v935, %v1019
    %v1021 = vpop.f32.mrf.mxu0
    %1022 = vmatprep.mubr.f32.mxu0 0.0
    %1023 = vmatmul.mubr.f32.gmra.mxu0 %v943
    %v1024 = vpop.f32.mrf.mxu0
    %v1025 = vadd.f32 %v935, %v1024
    %v1026 = vpop.f32.mrf.mxu0
    %1027 = vmatprep.mubr.f32.mxu0 0.0
    %1028 = vmatmul.mubr.f32.gmra.mxu0 %v946
    %v1029 = vpop.f32.mrf.mxu0
    %v1030 = vadd.f32 %v935, %v1029
    %v1031 = vpop.f32.mrf.mxu0
    %1032 = vdwg.mxu0
    %v1033 = vtanh.pop %v1015
    %v1034 = vtanh.pop %v1020
    %v1035 = vtanh.pop %v1025
    %v1036 = vtanh.pop %v1030
    %v1037 = vxor.u32 %v1015, 2147483648
    %v1038 = vxor.u32 %v1020, 2147483648
    %v1039 = vxor.u32 %v1025, 2147483648
    %v1040 = vxor.u32 %v1030, 2147483648
    %v1041 = vmul.f32 %v1037, 1.442695
    %v1042 = vpow.pop %v1041
    %v1043 = vmul.f32 %v1038, 1.442695
    %v1044 = vpow.pop %v1043
    %v1045 = vmul.f32 %v1039, 1.442695
    %v1046 = vpow.pop %v1045
    %v1047 = vmul.f32 %v1040, 1.442695
    %v1048 = vpow.pop %v1047
    %v1049 = vadd.f32 %v1042, 1.0
    %v1050 = vadd.f32 %v1044, 1.0
    %v1051 = vadd.f32 %v1046, 1.0
    %v1052 = vadd.f32 %v1048, 1.0
    %v1053 = vrcp.pop %v1049
    %v1054 = vmul.f32 1.0, %v1053
    %v1055 = vrcp.pop %v1050
    %v1056 = vmul.f32 1.0, %v1055
    %v1057 = vrcp.pop %v1051
    %v1058 = vmul.f32 1.0, %v1057
    %v1059 = vrcp.pop %v1052
    %v1060 = vmul.f32 1.0, %v1059
    %vm1061 = vcmask 64512
    %v1062 = vsel %vm1061, %v1033, -inf
    %v1063 = vsel %vm1061, %v1034, -inf
    %v1064 = vmax.f32 %v1062, %v1063
    %v1065 = vrot.slane %v1064, 4
    %v1066 = vmax.f32 %v1064, %v1065
    %v1067 = vrot.slane %v1066, 2
    %v1068 = vmax.f32 %v1066, %v1067
    %v1069 = vrot.slane %v1068, 1
    %v1070 = vmax.f32 %v1068, %v1069
    %v1071 = vsel %vm1061, %v1035, -inf
    %v1072 = vsel %vm1061, %v1036, -inf
    %v1073 = vmax.f32 %v1071, %v1072
    %v1074 = vrot.slane %v1073, 4
    %v1075 = vmax.f32 %v1073, %v1074
    %v1076 = vrot.slane %v1075, 2
    %v1077 = vmax.f32 %v1075, %v1076
    %v1078 = vrot.slane %v1077, 1
    %v1079 = vmax.f32 %v1077, %v1078
    %v1080 = vsub.f32 %v1033, %v1070
    %v1081 = vsub.f32 %v1034, %v1070
    %v1082 = vsub.f32 %v1035, %v1079
    %v1083 = vsub.f32 %v1036, %v1079
    %v1084 = vmul.f32 %v1080, 1.442695
    %v1085 = vpow.pop %v1084
    %v1086 = vmul.f32 %v1081, 1.442695
    %v1087 = vpow.pop %v1086
    %v1088 = vmul.f32 %v1082, 1.442695
    %v1089 = vpow.pop %v1088
    %v1090 = vmul.f32 %v1083, 1.442695
    %v1091 = vpow.pop %v1090
    %v1092 = vsel %vm1061, %v1085, 0.0
    %v1093 = vsel %vm1061, %v1087, 0.0
    %v1094 = vadd.f32 %v1092, %v1093
    %v1095 = vrot.slane %v1094, 4
    %v1096 = vadd.f32 %v1094, %v1095
    %v1097 = vrot.slane %v1096, 2
    %v1098 = vadd.f32 %v1096, %v1097
    %v1099 = vrot.slane %v1098, 1
    %v1100 = vadd.f32 %v1098, %v1099
    %v1101 = vsel %vm1061, %v1089, 0.0
    %v1102 = vsel %vm1061, %v1091, 0.0
    %v1103 = vadd.f32 %v1101, %v1102
    %v1104 = vrot.slane %v1103, 4
    %v1105 = vadd.f32 %v1103, %v1104
    %v1106 = vrot.slane %v1105, 2
    %v1107 = vadd.f32 %v1105, %v1106
    %v1108 = vrot.slane %v1107, 1
    %v1109 = vadd.f32 %v1107, %v1108
    %v1110 = vrcp.pop %v1100
    %v1111 = vrcp.pop %v1109
    %v1112 = vmul.f32 %v1085, %v1110
    %v1113 = vmul.f32 %v1087, %v1110
    %v1114 = vmul.f32 %v1089, %v1111
    %v1115 = vmul.f32 %v1091, %v1111
    %1120 = vrot.lane.b32.xlu0 %v1054, 120
    %v1121 = vpop.permute.xlu0 %1120
    %1122 = vrot.lane.b32.xlu0 %v1056, 120
    %v1123 = vpop.permute.xlu0 %1122
    %1124 = vrot.lane.b32.xlu0 %v1058, 120
    %v1125 = vpop.permute.xlu0 %1124
    %1126 = vrot.lane.b32.xlu0 %v1060, 120
    %v1127 = vpop.permute.xlu0 %1126
    %v1132 = vmul.f32 %v1112, %v1121
    %v1133 = vmul.f32 %v1113, %v1123
    %v1134 = vmul.f32 %v1114, %v1125
    %v1135 = vmul.f32 %v1115, %v1127
    %v1136 = vsel %vm1061, %v1132, 0.0
    %v1137 = vsel %vm1061, %v1133, 0.0
    %v1138 = vadd.f32 %v1136, %v1137
    %v1139 = vrot.slane %v1138, 4
    %v1140 = vadd.f32 %v1138, %v1139
    %v1141 = vrot.slane %v1140, 2
    %v1142 = vadd.f32 %v1140, %v1141
    %v1143 = vrot.slane %v1142, 1
    %v1144 = vadd.f32 %v1142, %v1143
    %v1145 = vsel %vm1061, %v1134, 0.0
    %v1146 = vsel %vm1061, %v1135, 0.0
    %v1147 = vadd.f32 %v1145, %v1146
    %v1148 = vrot.slane %v1147, 4
    %v1149 = vadd.f32 %v1147, %v1148
    %v1150 = vrot.slane %v1149, 2
    %v1151 = vadd.f32 %v1149, %v1150
    %v1152 = vrot.slane %v1151, 1
    %v1153 = vadd.f32 %v1151, %v1152
    %1154 = vst.msk [vmem:[%s2] sm:$0xff] %vm1061, %v1121
    %1155 = vst.msk [vmem:[%s2 + $0x8] sm:$0xff] %vm1061, %v1123
    %1156 = vst.msk [vmem:[%s2 + $0x10] sm:$0xff] %vm1061, %v1125
    %1157 = vst.msk [vmem:[%s2 + $0x18] sm:$0xff] %vm1061, %v1127
    %vm1160 = vcmask 1041409
    %v1161 = vsel %vm1160, %v1153, %v1144
    %vm1163 = vcmask 58368
    %1164 = vst.msk [vmem:[%s2 + $0x20] sm:$0x3] %vm1163, %v1161
    // Predicated region
    $region14: #{audio_sed_forward.1} parent=1 // pred_check
      _
    $region15: #{audio_sed_forward.1} parent=1 // pred_check_branch
      %1166 = sbr.rel (0) target = $region17
    $region16: #{audio_sed_forward.1} parent=1 // pred_region
      _
    $region17: #{audio_sed_forward.1} parent=1 // pred_fallthru
      _
    // Predicated region
    $region18: #{audio_sed_forward.1} parent=1 // pred_check
      _
    $region19: #{audio_sed_forward.1} parent=1 // pred_check_branch
      %1168 = sbr.rel (0) target = $region21
    $region20: #{audio_sed_forward.1} parent=1 // pred_region
      _
    $region21: #{audio_sed_forward.1} parent=1 // pred_fallthru
      _
    %1169 = vsyncpa [#allocation3], 1

</llo_original>
